<compile_context>
chip_gen: v7x
topology: tpu7x:2x2x1
jax: 0.10.0
libtpu: 0.0.40
codegen_flags: <defaults>
</compile_context>

<pallas_src>
import functools

import jax
import jax.numpy as jnp
from jax.experimental import pallas as pl
from jax.experimental.pallas import tpu as pltpu

_LANE = 128
_SUBLANE = 8


def _round_up(x, m):
    return ((x + m - 1) // m) * m


def _fused_bn_relu_linear_kernel(x_ref, scale_ref, shift_ref, w_ref, b_ref, o_ref,
                                 *, matmul_dtype):
    """o = relu(x * scale + shift) @ W_tile + b_tile  for one (TM, F_pad) batch tile."""
    x = x_ref[...].astype(jnp.float32)                               # (TM, F_pad)
    h = jnp.maximum(x * scale_ref[...] + shift_ref[...], 0.0)        # folded BN + ReLU
    h = h.astype(matmul_dtype)                                       # bf16 MXU fast path
    o_ref[...] = b_ref[...] + jnp.dot(                               # bias folded in
        h, w_ref[...], preferred_element_type=jnp.float32)           # MXU, f32 accumulate


def prepare_params(params, eps=1e-5, matmul_dtype=jnp.bfloat16, tile_n=512):
    """One-time (outside the hot path) folding / padding of the module params.

    params: dict with
      bn_gamma, bn_beta, bn_mean, bn_var : (F,)
      w : (num_classes, F)   (PyTorch nn.Linear weight layout)
      b : (num_classes,)
    """
    C, F = params["w"].shape
    F_pad = _round_up(F, _LANE)
    C_pad = _round_up(C, _LANE)
    TN = min(_round_up(tile_n, _LANE), C_pad)   # output-column tile (multiple of 128)
    C_pad = _round_up(C_pad, TN)                # make TN divide the padded head width

    inv_std = 1.0 / jnp.sqrt(params["bn_var"].astype(jnp.float32) + eps)
    scale = params["bn_gamma"].astype(jnp.float32) * inv_std                     # (F,)
    shift = params["bn_beta"].astype(jnp.float32) \
        - params["bn_mean"].astype(jnp.float32) * scale                          # (F,)

    scale_p = jnp.zeros((1, F_pad), jnp.float32).at[0, :F].set(scale)
    shift_p = jnp.zeros((1, F_pad), jnp.float32).at[0, :F].set(shift)
    # Pre-transposed, lane-padded weight: zero rows/cols contribute nothing.
    w_t = jnp.zeros((F_pad, C_pad), jnp.float32).at[:F, :C].set(
        params["w"].T.astype(jnp.float32)).astype(matmul_dtype)
    b_p = jnp.zeros((1, C_pad), jnp.float32).at[0, :C].set(
        params["b"].astype(jnp.float32))

    return {
        "scale": scale_p, "shift": shift_p, "w_t": w_t, "b": b_p,
        "F": F, "C": C, "F_pad": F_pad, "C_pad": C_pad, "TN": TN,
        "matmul_dtype": matmul_dtype,
    }


def intermediate_fusion_classifier_forward(x, prepared, *, tile_m=512):
    """x: (B, F) -> (B, num_classes), using the pre-folded params."""
    B, F = x.shape
    assert F == prepared["F"], "in_features mismatch"
    F_pad, C_pad, C, TN = prepared["F_pad"], prepared["C_pad"], prepared["C"], prepared["TN"]
    matmul_dtype = prepared["matmul_dtype"]
    w_itemsize = jnp.dtype(matmul_dtype).itemsize

    # ---- Batch tile selection ------------------------------------------------
    B_su = _round_up(B, _SUBLANE)
    TM = _round_up(min(tile_m, B_su), _SUBLANE)
    # Keep >= 2 batch grid steps when possible so the "parallel" axis can shard
    # across v7x's 2 TensorCores (free elsewhere).
    if B_su >= 2 * _SUBLANE and TM > _SUBLANE:
        TM = min(TM, max(_SUBLANE, _round_up(B_su // 2, _SUBLANE)))

    try:
        vmem_phys = pltpu.get_tpu_info().vmem_capacity_bytes
    except Exception:  # be conservative (v7x has 64 MiB per TensorCore)
        vmem_phys = 64 << 20

    def vmem_need(tm, x_item):
        # x tile + out tile double-buffered; params counted double-buffered too
        # (honest even if the Buffered(1) request is not honoured).
        resident = (F_pad * TN * w_itemsize
                    + 2 * _SUBLANE * F_pad * 4 + _SUBLANE * TN * 4)
        return 2 * tm * F_pad * x_item + 2 * tm * TN * 4 + 2 * resident

    budget = int(0.45 * vmem_phys)
    while TM > _SUBLANE and vmem_need(TM, 4) > budget:
        TM = max(_SUBLANE, _round_up(TM // 2, _SUBLANE))

    B_pad = _round_up(B, TM)
    grid_m = B_pad // TM
    grid_n = C_pad // TN

    # ---- Stage x: avoid a padded HBM copy when shapes already align ----------
    need_pad = (F != F_pad) or (B_pad != B)
    if need_pad:
        # Single fused pad+cast pass; bf16 halves both the staged copy and the
        # per-tile DMA bytes.  Padded feature cols see scale=shift=0 -> relu(0)=0.
        x_p = jnp.zeros((B_pad, F_pad), matmul_dtype).at[:B, :F].set(
            x.astype(matmul_dtype))
    else:
        x_p = x  # read directly; upcast to f32 inside the kernel
    x_itemsize = jnp.dtype(x_p.dtype).itemsize

    cost = pl.CostEstimate(
        flops=2 * B_pad * F_pad * C_pad,
        transcendentals=0,
        bytes_accessed=(B_pad * F_pad * x_itemsize + B_pad * C_pad * 4
                        + F_pad * C_pad * w_itemsize + 2 * F_pad * 4 + C_pad * 4),
    )

    need = vmem_need(TM, x_itemsize)
    compiler_kwargs = dict(dimension_semantics=("parallel", "arbitrary"))
    if need > (16 << 20):  # only raise above the conservative default scoped limit
        cap = max(16 << 20, int(0.625 * vmem_phys))   # ~40 MiB on v7x, ~80 MiB v5e/v6e
        compiler_kwargs["vmem_limit_bytes"] = int(min(max(need + (4 << 20), 16 << 20), cap))

    kernel = functools.partial(_fused_bn_relu_linear_kernel,
                               matmul_dtype=matmul_dtype)

    def make_call(use_single_buffer):
        def resident_spec(shape, index_map, sb):
            if sb:
                return pl.BlockSpec(shape, index_map, pipeline_mode=pl.Buffered(1))
            return pl.BlockSpec(shape, index_map)

        # Weight/bias are only truly constant-index when there is a single C tile.
        w_const = use_single_buffer and grid_n == 1
        in_specs = [
            pl.BlockSpec((TM, F_pad), lambda i, j: (i, 0)),                  # batch-tiled x
            resident_spec((1, F_pad), lambda i, j: (0, 0), use_single_buffer),   # scale
            resident_spec((1, F_pad), lambda i, j: (0, 0), use_single_buffer),   # shift
            resident_spec((F_pad, TN), lambda i, j: (0, j), w_const),            # weight tile
            resident_spec((1, TN), lambda i, j: (0, j), w_const),                # bias tile
        ]
        return pl.pallas_call(
            kernel,
            out_shape=jax.ShapeDtypeStruct((B_pad, C_pad), jnp.float32),
            grid=(grid_m, grid_n),
            in_specs=in_specs,
            out_specs=pl.BlockSpec((TM, TN), lambda i, j: (i, j)),
            compiler_params=pltpu.CompilerParams(**compiler_kwargs),
            cost_estimate=cost,
        )

    args = (x_p, prepared["scale"], prepared["shift"], prepared["w_t"], prepared["b"])
    try:
        out = make_call(True)(*args)
    except Exception:
        # Fallback if single-buffering via pipeline_mode is unsupported.
        out = make_call(False)(*args)

    if B_pad != B or C_pad != C:
        out = out[:B, :C]
    return out


def _reference_forward(x, params):
    """Pure-JAX reference (eval-mode BatchNorm1d -> ReLU -> Linear)."""
    eps = 1e-5
    xn = (x - params["bn_mean"]) / jnp.sqrt(params["bn_var"] + eps)
    xn = xn * params["bn_gamma"] + params["bn_beta"]
    h = jnp.maximum(xn, 0.0)
    return h @ params["w"].T + params["b"]


if __name__ == "__main__":
    batch, in_features, num_classes = 8, 32, 16

    key = jax.random.PRNGKey(0)
    keys = jax.random.split(key, 10)

    x = jax.random.normal(keys[0], (batch, in_features), dtype=jnp.float32)
    params = {
        "bn_gamma": jax.random.normal(keys[1], (in_features,), jnp.float32) * 0.1 + 1.0,
        "bn_beta": jax.random.normal(keys[2], (in_features,), jnp.float32) * 0.1,
        "bn_mean": jax.random.normal(keys[3], (in_features,), jnp.float32) * 0.1,
        "bn_var": jnp.abs(jax.random.normal(keys[4], (in_features,), jnp.float32)) + 0.5,
        # nn.Linear(in_features, num_classes): weight (num_classes, in_features)
        "w": jax.random.normal(keys[5], (num_classes, in_features), jnp.float32)
             * (1.0 / jnp.sqrt(in_features)),
        "b": jax.random.normal(keys[6], (num_classes,), jnp.float32) * 0.01,
    }
    ref = _reference_forward(x, params)

    # 1) Default bf16 matmul-input path (fast on every generation), f32 accumulation.
    prep_bf16 = prepare_params(params)
    out_bf16 = jax.block_until_ready(
        intermediate_fusion_classifier_forward(x, prep_bf16))
    assert out_bf16.shape == (batch, num_classes)
    assert jnp.allclose(out_bf16, ref, atol=5e-2, rtol=5e-2), "bf16 mismatch vs reference"

    # 2) Opt-in f32 matmul path: tight tolerance.
    prep_f32 = prepare_params(params, matmul_dtype=jnp.float32)
    out_f32 = jax.block_until_ready(
        intermediate_fusion_classifier_forward(x, prep_f32))
    assert jnp.allclose(out_f32, ref, atol=1e-4, rtol=1e-4), "f32 mismatch vs reference"

    # 3) Multi-step, padded batch grid (B=20, TM forced to 8 -> grid_m=3).
    x_big = jax.random.normal(keys[7], (20, in_features), dtype=jnp.float32)
    out_big = jax.block_until_ready(
        intermediate_fusion_classifier_forward(x_big, prep_f32, tile_m=8))
    ref_big = _reference_forward(x_big, params)
    assert out_big.shape == (20, num_classes)
    assert jnp.allclose(out_big, ref_big, atol=1e-4, rtol=1e-4), "tiled mismatch vs reference"

    # 4) C-tiled path (num_classes=200 -> C_pad=256, TN=128 -> grid_n=2).
    params2 = dict(params)
    params2["w"] = jax.random.normal(keys[8], (200, in_features), jnp.float32) \
        * (1.0 / jnp.sqrt(in_features))
    params2["b"] = jax.random.normal(keys[9], (200,), jnp.float32) * 0.01
    prep2 = prepare_params(params2, matmul_dtype=jnp.float32, tile_n=128)
    out2 = jax.block_until_ready(
        intermediate_fusion_classifier_forward(x, prep2))
    ref2 = _reference_forward(x, params2)
    assert out2.shape == (batch, 200)
    assert jnp.allclose(out2, ref2, atol=1e-4, rtol=1e-4), "C-tiled mismatch vs reference"

    print("KERNEL_OK")
</pallas_src>

<mosaic_0001>
module attributes {stable_mosaic.version = 11 : i64} {
  func.func @_fused_bn_relu_linear_kernel(%arg0: i32, %arg1: i32, %arg2: memref<8x128xbf16, #tpu.memory_space<vmem>>, %arg3: memref<1x128xf32, #tpu.memory_space<vmem>>, %arg4: memref<1x128xf32, #tpu.memory_space<vmem>>, %arg5: memref<128x128xbf16, #tpu.memory_space<vmem>>, %arg6: memref<1x128xf32, #tpu.memory_space<vmem>>, %arg7: memref<8x128xf32, #tpu.memory_space<vmem>>) attributes {dimension_semantics = [#tpu.dimension_semantics<parallel>, #tpu.dimension_semantics<arbitrary>], iteration_bounds = array<i64: 1, 1>, scalar_prefetch = 0 : i64, scratch_operands = 0 : i64, tpu.core_type = #tpu.core_type<tc>, window_params = [{transform_indices = @transform_0, window_bounds = array<i64: 8, 128>}, {pipeline_mode = #tpu.pipeline_mode<synchronous>, transform_indices = @transform_1, window_bounds = array<i64: 1, 128>}, {pipeline_mode = #tpu.pipeline_mode<synchronous>, transform_indices = @transform_2, window_bounds = array<i64: 1, 128>}, {pipeline_mode = #tpu.pipeline_mode<synchronous>, transform_indices = @transform_3, window_bounds = array<i64: 128, 128>}, {pipeline_mode = #tpu.pipeline_mode<synchronous>, transform_indices = @transform_4, window_bounds = array<i64: 1, 128>}, {transform_indices = @transform_5, window_bounds = array<i64: 8, 128>}]} {
    %c0 = arith.constant 0 : index
    %c0_0 = arith.constant 0 : index
    %0 = vector.load %arg2[%c0, %c0_0] : memref<8x128xbf16, #tpu.memory_space<vmem>>, vector<8x128xbf16>
    %1 = arith.extf %0 : vector<8x128xbf16> to vector<8x128xf32>
    %c0_1 = arith.constant 0 : index
    %c0_2 = arith.constant 0 : index
    %2 = vector.load %arg3[%c0_1, %c0_2] : memref<1x128xf32, #tpu.memory_space<vmem>>, vector<1x128xf32>
    %3 = vector.broadcast %2 : vector<1x128xf32> to vector<8x128xf32>
    %4 = arith.mulf %1, %3 : vector<8x128xf32>
    %c0_3 = arith.constant 0 : index
    %c0_4 = arith.constant 0 : index
    %5 = vector.load %arg4[%c0_3, %c0_4] : memref<1x128xf32, #tpu.memory_space<vmem>>, vector<1x128xf32>
    %6 = vector.broadcast %5 : vector<1x128xf32> to vector<8x128xf32>
    %7 = arith.addf %4, %6 : vector<8x128xf32>
    %cst = arith.constant 0.000000e+00 : f32
    %8 = vector.broadcast %cst : f32 to vector<8x128xf32>
    %9 = arith.maximumf %7, %8 : vector<8x128xf32>
    %10 = arith.truncf %9 : vector<8x128xf32> to vector<8x128xbf16>
    %c0_5 = arith.constant 0 : index
    %c0_6 = arith.constant 0 : index
    %11 = vector.load %arg6[%c0_5, %c0_6] : memref<1x128xf32, #tpu.memory_space<vmem>>, vector<1x128xf32>
    %c0_7 = arith.constant 0 : index
    %c0_8 = arith.constant 0 : index
    %12 = vector.load %arg5[%c0_7, %c0_8] : memref<128x128xbf16, #tpu.memory_space<vmem>>, vector<128x128xbf16>
    %cst_9 = arith.constant dense<0.000000e+00> : vector<8x128xf32>
    %13 = tpu.matmul %10, %12, %cst_9 {dimension_numbers = #tpu.dot_dimension_numbers<[1], [0], [0], [1], [0, 0, 1, 1], [], []>} : vector<8x128xbf16>, vector<128x128xbf16>, vector<8x128xf32> -> vector<8x128xf32>
    %14 = vector.broadcast %11 : vector<1x128xf32> to vector<8x128xf32>
    %15 = arith.addf %14, %13 : vector<8x128xf32>
    %c0_10 = arith.constant 0 : index
    %c0_11 = arith.constant 0 : index
    %16 = vector.load %arg7[%c0_10, %c0_11] : memref<8x128xf32, #tpu.memory_space<vmem>>, vector<8x128xf32>
    tpu.vector_store %arg7[%c0_10, %c0_11], %15 {strides = array<i32>} : memref<8x128xf32, #tpu.memory_space<vmem>>, vector<8x128xf32>,
    return
  }
  func.func @transform_0(%arg0: i32, %arg1: i32) -> (i32, i32) {
    %c0_i32 = arith.constant 0 : i32
    %c0_i32_0 = arith.constant 0 : i32
    return %arg0, %c0_i32 : i32, i32
  }
  func.func @transform_1(%arg0: i32, %arg1: i32) -> (i32, i32) {
    %c0_i32 = arith.constant 0 : i32
    %c0_i32_0 = arith.constant 0 : i32
    %c0_i32_1 = arith.constant 0 : i32
    return %c0_i32, %c0_i32_0 : i32, i32
  }
  func.func @transform_2(%arg0: i32, %arg1: i32) -> (i32, i32) {
    %c0_i32 = arith.constant 0 : i32
    %c0_i32_0 = arith.constant 0 : i32
    %c0_i32_1 = arith.constant 0 : i32
    return %c0_i32, %c0_i32_0 : i32, i32
  }
  func.func @transform_3(%arg0: i32, %arg1: i32) -> (i32, i32) {
    %c0_i32 = arith.constant 0 : i32
    %c0_i32_0 = arith.constant 0 : i32
    return %c0_i32, %arg1 : i32, i32
  }
  func.func @transform_4(%arg0: i32, %arg1: i32) -> (i32, i32) {
    %c0_i32 = arith.constant 0 : i32
    %c0_i32_0 = arith.constant 0 : i32
    return %c0_i32, %arg1 : i32, i32
  }
  func.func @transform_5(%arg0: i32, %arg1: i32) -> (i32, i32) {
    %c0_i32 = arith.constant 0 : i32
    return %arg0, %arg1 : i32, i32
  }
}

module attributes {stable_mosaic.version = 11 : i64} {
  func.func @_fused_bn_relu_linear_kernel(%arg0: i32, %arg1: i32, %arg2: memref<8x128xbf16, #tpu.memory_space<vmem>>, %arg3: memref<1x128xf32, #tpu.memory_space<vmem>>, %arg4: memref<1x128xf32, #tpu.memory_space<vmem>>, %arg5: memref<128x128xbf16, #tpu.memory_space<vmem>>, %arg6: memref<1x128xf32, #tpu.memory_space<vmem>>, %arg7: memref<8x128xf32, #tpu.memory_space<vmem>>) attributes {dimension_semantics = [#tpu.dimension_semantics<parallel>, #tpu.dimension_semantics<arbitrary>], iteration_bounds = array<i64: 1, 1>, scalar_prefetch = 0 : i64, scratch_operands = 0 : i64, tpu.core_type = #tpu.core_type<tc>, window_params = [{transform_indices = @transform_0, window_bounds = array<i64: 8, 128>}, {pipeline_mode = #tpu.pipeline_mode<synchronous>, transform_indices = @transform_1, window_bounds = array<i64: 1, 128>}, {pipeline_mode = #tpu.pipeline_mode<synchronous>, transform_indices = @transform_2, window_bounds = array<i64: 1, 128>}, {transform_indices = @transform_3, window_bounds = array<i64: 128, 128>}, {transform_indices = @transform_4, window_bounds = array<i64: 1, 128>}, {transform_indices = @transform_5, window_bounds = array<i64: 8, 128>}]} {
    %c0 = arith.constant 0 : index
    %c0_0 = arith.constant 0 : index
    %0 = vector.load %arg2[%c0, %c0_0] : memref<8x128xbf16, #tpu.memory_space<vmem>>, vector<8x128xbf16>
    %1 = arith.extf %0 : vector<8x128xbf16> to vector<8x128xf32>
    %c0_1 = arith.constant 0 : index
    %c0_2 = arith.constant 0 : index
    %2 = vector.load %arg3[%c0_1, %c0_2] : memref<1x128xf32, #tpu.memory_space<vmem>>, vector<1x128xf32>
    %3 = vector.broadcast %2 : vector<1x128xf32> to vector<8x128xf32>
    %4 = arith.mulf %1, %3 : vector<8x128xf32>
    %c0_3 = arith.constant 0 : index
    %c0_4 = arith.constant 0 : index
    %5 = vector.load %arg4[%c0_3, %c0_4] : memref<1x128xf32, #tpu.memory_space<vmem>>, vector<1x128xf32>
    %6 = vector.broadcast %5 : vector<1x128xf32> to vector<8x128xf32>
    %7 = arith.addf %4, %6 : vector<8x128xf32>
    %cst = arith.constant 0.000000e+00 : f32
    %8 = vector.broadcast %cst : f32 to vector<8x128xf32>
    %9 = arith.maximumf %7, %8 : vector<8x128xf32>
    %10 = arith.truncf %9 : vector<8x128xf32> to vector<8x128xbf16>
    %c0_5 = arith.constant 0 : index
    %c0_6 = arith.constant 0 : index
    %11 = vector.load %arg6[%c0_5, %c0_6] : memref<1x128xf32, #tpu.memory_space<vmem>>, vector<1x128xf32>
    %c0_7 = arith.constant 0 : index
    %c0_8 = arith.constant 0 : index
    %12 = vector.load %arg5[%c0_7, %c0_8] : memref<128x128xbf16, #tpu.memory_space<vmem>>, vector<128x128xbf16>
    %cst_9 = arith.constant dense<0.000000e+00> : vector<8x128xf32>
    %13 = tpu.matmul %10, %12, %cst_9 {dimension_numbers = #tpu.dot_dimension_numbers<[1], [0], [0], [1], [0, 0, 1, 1], [], []>} : vector<8x128xbf16>, vector<128x128xbf16>, vector<8x128xf32> -> vector<8x128xf32>
    %14 = vector.broadcast %11 : vector<1x128xf32> to vector<8x128xf32>
    %15 = arith.addf %14, %13 : vector<8x128xf32>
    %c0_10 = arith.constant 0 : index
    %c0_11 = arith.constant 0 : index
    %16 = vector.load %arg7[%c0_10, %c0_11] : memref<8x128xf32, #tpu.memory_space<vmem>>, vector<8x128xf32>
    tpu.vector_store %arg7[%c0_10, %c0_11], %15 {strides = array<i32>} : memref<8x128xf32, #tpu.memory_space<vmem>>, vector<8x128xf32>,
    return
  }
  func.func @transform_0(%arg0: i32, %arg1: i32) -> (i32, i32) {
    %c0_i32 = arith.constant 0 : i32
    %c0_i32_0 = arith.constant 0 : i32
    return %arg0, %c0_i32 : i32, i32
  }
  func.func @transform_1(%arg0: i32, %arg1: i32) -> (i32, i32) {
    %c0_i32 = arith.constant 0 : i32
    %c0_i32_0 = arith.constant 0 : i32
    %c0_i32_1 = arith.constant 0 : i32
    return %c0_i32, %c0_i32_0 : i32, i32
  }
  func.func @transform_2(%arg0: i32, %arg1: i32) -> (i32, i32) {
    %c0_i32 = arith.constant 0 : i32
    %c0_i32_0 = arith.constant 0 : i32
    %c0_i32_1 = arith.constant 0 : i32
    return %c0_i32, %c0_i32_0 : i32, i32
  }
  func.func @transform_3(%arg0: i32, %arg1: i32) -> (i32, i32) {
    %c0_i32 = arith.constant 0 : i32
    %c0_i32_0 = arith.constant 0 : i32
    return %c0_i32, %arg1 : i32, i32
  }
  func.func @transform_4(%arg0: i32, %arg1: i32) -> (i32, i32) {
    %c0_i32 = arith.constant 0 : i32
    %c0_i32_0 = arith.constant 0 : i32
    return %c0_i32, %arg1 : i32, i32
  }
  func.func @transform_5(%arg0: i32, %arg1: i32) -> (i32, i32) {
    %c0_i32 = arith.constant 0 : i32
    return %arg0, %arg1 : i32, i32
  }
}

</mosaic_0001>

<llo_original>
// kernel: tpu_custom_call.1
$region0: #{tpu_custom_call.1}
  #allocation0 [shape = 'u32[]', space=smem, size = 0x4, offset = 0x4, fixed_abs, tag = 'smem constant byte address 0x4 - core index']
  #allocation1 [shape = 'u32[144,128]{1,0:T(1,128)}', space=vmem, size = 0x12000, scoped, tag = 'internal scratch']
  %s0 = inlined_call_operand.hbm [shape: bf16[8,128], index: 0, kind: input, shape index: {}]
  %s1 = inlined_call_operand.vmem [shape: f32[1,128], index: 1, kind: input, shape index: {}]
  %s2 = inlined_call_operand.vmem [shape: f32[1,128], index: 2, kind: input, shape index: {}]
  %s3 = inlined_call_operand.hbm [shape: bf16[128,128], index: 3, kind: input, shape index: {}]
  %s4 = inlined_call_operand.vmem [shape: f32[1,128], index: 4, kind: input, shape index: {}]
  %s5 = inlined_call_operand.hbm [shape: f32[8,128], index: 5, kind: output, shape index: {}]
  %s6 = sld [smem:[#allocation0]]
  $region38: #{tpu_custom_call.1} parent=0
    _
  %s8 = ssub.s32 1, %s6
  %s9 = scalar_select 0, %s8, %s6
  $region1: #{tpu_custom_call.1} parent=0
    #allocation2 [shape = 'u8[2048]{0}', space=vmem, size = 0x800, scoped, tag = 'input window, operand 0, single buffered']
    #allocation3 [shape = 's32[1]{0}', space=sflag, size = 0x4, scoped, tag = 'scoped memory for tpu_custom_call.1']
    #allocation4 [shape = 's32[1]{0}', space=sflag, size = 0x4, scoped, tag = 'scoped memory for tpu_custom_call.1']
    #allocation5 [shape = 'u8[32768]{0}', space=vmem, size = 0x8000, scoped, tag = 'input window, operand 3, single buffered']
    #allocation6 [shape = 's32[1]{0}', space=sflag, size = 0x4, scoped, tag = 'scoped memory for tpu_custom_call.1']
    #allocation7 [shape = 'u8[4096]{0}', space=vmem, size = 0x1000, scoped, tag = 'output window, operand 0, single buffered']
    %10 = vsyncpa [#allocation3], 0
    %11 = vsyncpa [#allocation6], 0
    %12 = vsyncpa [#allocation4], 0
    // Predicated region
    $region2: #{tpu_custom_call.1} parent=1 // pred_check
      _
    $region3: #{tpu_custom_call.1} parent=1 // pred_check_branch
      %14 = sbr.rel (0) target = $region5
    $region4: #{tpu_custom_call.1} parent=1 // pred_region
      %s16 = ssub.s32 64, 64
      %17 = vsyncadd [#allocation3], %s16
      %s19 = sshll.u32 [#allocation2], 4
      %s20 = int_to_ptr.vmem [resolvable:$true] %s19
      %22 = dma.hbm_to_vmem [thread:$0]  %s0, 64, %s20, [#allocation3]
    $region5: #{tpu_custom_call.1} parent=1 // pred_fallthru
      _
    // Predicated region
    $region6: #{tpu_custom_call.1} parent=1 // pred_check
      _
    $region7: #{tpu_custom_call.1} parent=1 // pred_check_branch
      %24 = sbr.rel (0) target = $region9
    $region8: #{tpu_custom_call.1} parent=1 // pred_region
      _
    $region9: #{tpu_custom_call.1} parent=1 // pred_fallthru
      _
    // Predicated region
    $region10: #{tpu_custom_call.1} parent=1 // pred_check
      _
    $region11: #{tpu_custom_call.1} parent=1 // pred_check_branch
      %26 = sbr.rel (0) target = $region13
    $region12: #{tpu_custom_call.1} parent=1 // pred_region
      _
    $region13: #{tpu_custom_call.1} parent=1 // pred_fallthru
      _
    // Predicated region
    $region14: #{tpu_custom_call.1} parent=1 // pred_check
      _
    $region15: #{tpu_custom_call.1} parent=1 // pred_check_branch
      %28 = sbr.rel (0) target = $region17
    $region16: #{tpu_custom_call.1} parent=1 // pred_region
      %s30 = ssub.s32 1024, 1024
      %31 = vsyncadd [#allocation6], %s30
      %s32 = sshll.u32 [#allocation5], 4
      %s33 = int_to_ptr.vmem [resolvable:$true] %s32
      %38 = dma.hbm_to_vmem [thread:$0]  %s3, 1024, %s33, [#allocation6], 64, 64, 4
    $region17: #{tpu_custom_call.1} parent=1 // pred_fallthru
      _
    // Predicated region
    $region18: #{tpu_custom_call.1} parent=1 // pred_check
      _
    $region19: #{tpu_custom_call.1} parent=1 // pred_check_branch
      %40 = sbr.rel (0) target = $region21
    $region20: #{tpu_custom_call.1} parent=1 // pred_region
      _
    $region21: #{tpu_custom_call.1} parent=1 // pred_fallthru
      _
    // Predicated region
    $region22: #{tpu_custom_call.1} parent=1 // pred_check
      _
    $region23: #{tpu_custom_call.1} parent=1 // pred_check_branch
      %42 = sbr.rel (0) target = $region25
    $region24: #{tpu_custom_call.1} parent=1 // pred_region
      %43 = dma.done [#allocation3], 64
    $region25: #{tpu_custom_call.1} parent=1 // pred_fallthru
      _
    // Predicated region
    $region26: #{tpu_custom_call.1} parent=1 // pred_check
      _
    $region27: #{tpu_custom_call.1} parent=1 // pred_check_branch
      %45 = sbr.rel (0) target = $region29
    $region28: #{tpu_custom_call.1} parent=1 // pred_region
      %46 = dma.done [#allocation6], 1024
    $region29: #{tpu_custom_call.1} parent=1 // pred_fallthru
      _
    %v48 = vld [vmem:[#allocation2] sm:$0xf]
    %v49 = vunpack.c.l.bf16 %v48
    %v50 = vld [vmem:[%s1] sm:$0x1]
    %v52 = vlaneseq
    %v53 = vshrl.u32 %v52, 7
    %v54 = vsub.s32 0, %v53
    %v55 = vrot.slane %v50, %v54
    %v57 = vmul.f32 %v49, %v55
    %v58 = vld [vmem:[%s2] sm:$0x1]
    %v60 = vlaneseq
    %v61 = vshrl.u32 %v60, 7
    %v62 = vsub.s32 0, %v61
    %v63 = vrot.slane %v58, %v62
    %v65 = vadd.f32 %v57, %v63
    %v66 = vmax.f32 %v65, 0.0
    %v67 = vpack.c.bf16 %v66, %v66
    %v68 = vld [vmem:[%s4] sm:$0x1]
    %v69 = vld [vmem:[#allocation5] sm:$0xf]
    %v70 = vld [vmem:[#allocation5 + $0x4] sm:$0xf]
    %v71 = vld [vmem:[#allocation5 + $0x8] sm:$0xf]
    %v72 = vld [vmem:[#allocation5 + $0xc] sm:$0xf]
    %v73 = vld [vmem:[#allocation5 + $0x10] sm:$0xf]
    %v74 = vld [vmem:[#allocation5 + $0x14] sm:$0xf]
    %v75 = vld [vmem:[#allocation5 + $0x18] sm:$0xf]
    %v76 = vld [vmem:[#allocation5 + $0x1c] sm:$0xf]
    %v77 = vld [vmem:[#allocation5 + $0x20] sm:$0xf]
    %v78 = vld [vmem:[#allocation5 + $0x24] sm:$0xf]
    %v79 = vld [vmem:[#allocation5 + $0x28] sm:$0xf]
    %v80 = vld [vmem:[#allocation5 + $0x2c] sm:$0xf]
    %v81 = vld [vmem:[#allocation5 + $0x30] sm:$0xf]
    %v82 = vld [vmem:[#allocation5 + $0x34] sm:$0xf]
    %v83 = vld [vmem:[#allocation5 + $0x38] sm:$0xf]
    %v84 = vld [vmem:[#allocation5 + $0x3c] sm:$0xf]
    %v101 = vunpack.c.l.b16 %v69
    %v102 = vunpack.c.l.b16 %v70
    %v103 = vunpack.c.l.b16 %v71
    %v104 = vunpack.c.l.b16 %v72
    %v105 = vunpack.c.l.b16 %v73
    %v106 = vunpack.c.l.b16 %v74
    %v107 = vunpack.c.l.b16 %v75
    %v108 = vunpack.c.l.b16 %v76
    %v109 = vunpack.c.l.b16 %v77
    %v110 = vunpack.c.l.b16 %v78
    %v111 = vunpack.c.l.b16 %v79
    %v112 = vunpack.c.l.b16 %v80
    %v113 = vunpack.c.l.b16 %v81
    %v114 = vunpack.c.l.b16 %v82
    %v115 = vunpack.c.l.b16 %v83
    %v116 = vunpack.c.l.b16 %v84
    %v117 = vpack.c.b16 %v102, %v101
    %v118 = vpack.c.b16 %v104, %v103
    %v119 = vpack.c.b16 %v106, %v105
    %v120 = vpack.c.b16 %v108, %v107
    %v121 = vpack.c.b16 %v110, %v109
    %v122 = vpack.c.b16 %v112, %v111
    %v123 = vpack.c.b16 %v114, %v113
    %v124 = vpack.c.b16 %v116, %v115
    %133 = vmatprep.subr.bf16.mxu0 0
    %134 = vmatpush1.bf16.msra.mxu0 %v117
    %135 = vmatprep.subr.bf16.mxu0 0
    %136 = vmatpush1.bf16.msra.mxu0 %v118
    %137 = vmatprep.subr.bf16.mxu0 0
    %138 = vmatpush1.bf16.msra.mxu0 %v119
    %139 = vmatprep.subr.bf16.mxu0 0
    %140 = vmatpush1.bf16.msra.mxu0 %v120
    %141 = vmatprep.subr.bf16.mxu0 0
    %142 = vmatpush1.bf16.msra.mxu0 %v121
    %143 = vmatprep.subr.bf16.mxu0 0
    %144 = vmatpush1.bf16.msra.mxu0 %v122
    %145 = vmatprep.subr.bf16.mxu0 0
    %146 = vmatpush1.bf16.msra.mxu0 %v123
    %147 = vmatprep.subr.bf16.mxu0 0
    %148 = vmatpush1.bf16.msra.mxu0 %v124
    %149 = vmatprep.subr.bf16.mxu0 0
    %150 = vmatpush1.bf16.msra.mxu0 0
    %151 = vmatprep.subr.bf16.mxu0 0
    %152 = vmatpush1.bf16.msra.mxu0 0
    %153 = vmatprep.subr.bf16.mxu0 0
    %154 = vmatpush1.bf16.msra.mxu0 0
    %155 = vmatprep.subr.bf16.mxu0 0
    %156 = vmatpush1.bf16.msra.mxu0 0
    %157 = vmatprep.subr.bf16.mxu0 0
    %158 = vmatpush1.bf16.msra.mxu0 0
    %159 = vmatprep.subr.bf16.mxu0 0
    %160 = vmatpush1.bf16.msra.mxu0 0
    %161 = vmatprep.subr.bf16.mxu0 0
    %162 = vmatpush1.bf16.msra.mxu0 0
    %163 = vmatprep.subr.bf16.mxu0 0
    %164 = vmatpush1.bf16.msra.mxu0 0
    %165 = vmatprep.mubr.bf16.mxu0 0
    %166 = vmatmul.mubr.bf16.gmra.mrb[0].mxu0 %v67
    %v167 = vpop.f32.mrb[0].mxu0
    %v168 = vadd.f32 0.0, %v167
    %v169 = vpop.f32.mrb[0].mxu0
    %v170 = vpop.f32.mrb[0].mxu0
    %v171 = vpop.f32.mrb[0].mxu0
    %172 = vdwg.mxu0
    %v174 = vlaneseq
    %v175 = vshrl.u32 %v174, 7
    %v176 = vsub.s32 0, %v175
    %v177 = vrot.slane %v68, %v176
    %v179 = vadd.f32 %v177, %v168
    %180 = vst [vmem:[#allocation7] sm:$0xff] %v179
    // Predicated region
    $region30: #{tpu_custom_call.1} parent=1 // pred_check
      _
    $region31: #{tpu_custom_call.1} parent=1 // pred_check_branch
      %182 = sbr.rel (0) target = $region33
    $region32: #{tpu_custom_call.1} parent=1 // pred_region
      %s184 = ssub.s32 128, 128
      %185 = vsyncadd [#allocation4], %s184
      %s187 = sshll.u32 [#allocation7], 4
      %s188 = int_to_ptr.vmem [resolvable:$true] %s187
      %190 = dma.vmem_to_hbm [thread:$0]  %s188, 128, %s5, [#allocation4]
    $region33: #{tpu_custom_call.1} parent=1 // pred_fallthru
      _
    // Predicated region
    $region34: #{tpu_custom_call.1} parent=1 // pred_check
      _
    $region35: #{tpu_custom_call.1} parent=1 // pred_check_branch
      %192 = sbr.rel (0) target = $region37
    $region36: #{tpu_custom_call.1} parent=1 // pred_region
      %193 = dma.done [#allocation4], 128
    $region37: #{tpu_custom_call.1} parent=1 // pred_fallthru
      _
    %194 = vsyncpa [#allocation3], 1
    %195 = vsyncpa [#allocation6], 1
    %196 = vsyncpa [#allocation4], 1

// kernel: tpu_custom_call.1
$region0: #{tpu_custom_call.1}
  #allocation0 [shape = 'u32[]', space=smem, size = 0x4, offset = 0x4, fixed_abs, tag = 'smem constant byte address 0x4 - core index']
  #allocation1 [shape = 'u32[144,128]{1,0:T(1,128)}', space=vmem, size = 0x12000, scoped, tag = 'internal scratch']
  %s0 = inlined_call_operand.hbm [shape: bf16[8,128], index: 0, kind: input, shape index: {}]
  %s1 = inlined_call_operand.vmem [shape: f32[1,128], index: 1, kind: input, shape index: {}]
  %s2 = inlined_call_operand.vmem [shape: f32[1,128], index: 2, kind: input, shape index: {}]
  %s3 = inlined_call_operand.hbm [shape: bf16[128,128], index: 3, kind: input, shape index: {}]
  %s4 = inlined_call_operand.vmem [shape: f32[1,128], index: 4, kind: input, shape index: {}]
  %s5 = inlined_call_operand.hbm [shape: f32[8,128], index: 5, kind: output, shape index: {}]
  %s6 = sld [smem:[#allocation0]]
  $region38: #{tpu_custom_call.1} parent=0
    _
  %s8 = ssub.s32 1, %s6
  %s9 = scalar_select 0, %s8, %s6
  $region1: #{tpu_custom_call.1} parent=0
    #allocation2 [shape = 'u8[2048]{0}', space=vmem, size = 0x800, scoped, tag = 'input window, operand 0, single buffered']
    #allocation3 [shape = 's32[1]{0}', space=sflag, size = 0x4, scoped, tag = 'scoped memory for tpu_custom_call.1']
    #allocation4 [shape = 's32[1]{0}', space=sflag, size = 0x4, scoped, tag = 'scoped memory for tpu_custom_call.1']
    #allocation5 [shape = 'u8[32768]{0}', space=vmem, size = 0x8000, scoped, tag = 'input window, operand 3, single buffered']
    #allocation6 [shape = 's32[1]{0}', space=sflag, size = 0x4, scoped, tag = 'scoped memory for tpu_custom_call.1']
    #allocation7 [shape = 'u8[4096]{0}', space=vmem, size = 0x1000, scoped, tag = 'output window, operand 0, single buffered']
    %10 = vsyncpa [#allocation3], 0
    %11 = vsyncpa [#allocation6], 0
    %12 = vsyncpa [#allocation4], 0
    // Predicated region
    $region2: #{tpu_custom_call.1} parent=1 // pred_check
      _
    $region3: #{tpu_custom_call.1} parent=1 // pred_check_branch
      %14 = sbr.rel (0) target = $region5
    $region4: #{tpu_custom_call.1} parent=1 // pred_region
      %s16 = ssub.s32 64, 64
      %17 = vsyncadd [#allocation3], %s16
      %s19 = sshll.u32 [#allocation2], 4
      %s20 = int_to_ptr.vmem [resolvable:$true] %s19
      %22 = dma.hbm_to_vmem [thread:$0]  %s0, 64, %s20, [#allocation3]
    $region5: #{tpu_custom_call.1} parent=1 // pred_fallthru
      _
    // Predicated region
    $region6: #{tpu_custom_call.1} parent=1 // pred_check
      _
    $region7: #{tpu_custom_call.1} parent=1 // pred_check_branch
      %24 = sbr.rel (0) target = $region9
    $region8: #{tpu_custom_call.1} parent=1 // pred_region
      _
    $region9: #{tpu_custom_call.1} parent=1 // pred_fallthru
      _
    // Predicated region
    $region10: #{tpu_custom_call.1} parent=1 // pred_check
      _
    $region11: #{tpu_custom_call.1} parent=1 // pred_check_branch
      %26 = sbr.rel (0) target = $region13
    $region12: #{tpu_custom_call.1} parent=1 // pred_region
      _
    $region13: #{tpu_custom_call.1} parent=1 // pred_fallthru
      _
    // Predicated region
    $region14: #{tpu_custom_call.1} parent=1 // pred_check
      _
    $region15: #{tpu_custom_call.1} parent=1 // pred_check_branch
      %28 = sbr.rel (0) target = $region17
    $region16: #{tpu_custom_call.1} parent=1 // pred_region
      %s30 = ssub.s32 1024, 1024
      %31 = vsyncadd [#allocation6], %s30
      %s32 = sshll.u32 [#allocation5], 4
      %s33 = int_to_ptr.vmem [resolvable:$true] %s32
      %38 = dma.hbm_to_vmem [thread:$0]  %s3, 1024, %s33, [#allocation6], 64, 64, 4
    $region17: #{tpu_custom_call.1} parent=1 // pred_fallthru
      _
    // Predicated region
    $region18: #{tpu_custom_call.1} parent=1 // pred_check
      _
    $region19: #{tpu_custom_call.1} parent=1 // pred_check_branch
      %40 = sbr.rel (0) target = $region21
    $region20: #{tpu_custom_call.1} parent=1 // pred_region
      _
    $region21: #{tpu_custom_call.1} parent=1 // pred_fallthru
      _
    // Predicated region
    $region22: #{tpu_custom_call.1} parent=1 // pred_check
      _
    $region23: #{tpu_custom_call.1} parent=1 // pred_check_branch
      %42 = sbr.rel (0) target = $region25
    $region24: #{tpu_custom_call.1} parent=1 // pred_region
      %43 = dma.done [#allocation3], 64
    $region25: #{tpu_custom_call.1} parent=1 // pred_fallthru
      _
    // Predicated region
    $region26: #{tpu_custom_call.1} parent=1 // pred_check
      _
    $region27: #{tpu_custom_call.1} parent=1 // pred_check_branch
      %45 = sbr.rel (0) target = $region29
    $region28: #{tpu_custom_call.1} parent=1 // pred_region
      %46 = dma.done [#allocation6], 1024
    $region29: #{tpu_custom_call.1} parent=1 // pred_fallthru
      _
    %v48 = vld [vmem:[#allocation2] sm:$0xf]
    %v49 = vunpack.c.l.bf16 %v48
    %v50 = vld [vmem:[%s1] sm:$0x1]
    %v52 = vlaneseq
    %v53 = vshrl.u32 %v52, 7
    %v54 = vsub.s32 0, %v53
    %v55 = vrot.slane %v50, %v54
    %v57 = vmul.f32 %v49, %v55
    %v58 = vld [vmem:[%s2] sm:$0x1]
    %v60 = vlaneseq
    %v61 = vshrl.u32 %v60, 7
    %v62 = vsub.s32 0, %v61
    %v63 = vrot.slane %v58, %v62
    %v65 = vadd.f32 %v57, %v63
    %v66 = vmax.f32 %v65, 0.0
    %v67 = vpack.c.bf16 %v66, %v66
    %v68 = vld [vmem:[%s4] sm:$0x1]
    %v69 = vld [vmem:[#allocation5] sm:$0xf]
    %v70 = vld [vmem:[#allocation5 + $0x4] sm:$0xf]
    %v71 = vld [vmem:[#allocation5 + $0x8] sm:$0xf]
    %v72 = vld [vmem:[#allocation5 + $0xc] sm:$0xf]
    %v73 = vld [vmem:[#allocation5 + $0x10] sm:$0xf]
    %v74 = vld [vmem:[#allocation5 + $0x14] sm:$0xf]
    %v75 = vld [vmem:[#allocation5 + $0x18] sm:$0xf]
    %v76 = vld [vmem:[#allocation5 + $0x1c] sm:$0xf]
    %v77 = vld [vmem:[#allocation5 + $0x20] sm:$0xf]
    %v78 = vld [vmem:[#allocation5 + $0x24] sm:$0xf]
    %v79 = vld [vmem:[#allocation5 + $0x28] sm:$0xf]
    %v80 = vld [vmem:[#allocation5 + $0x2c] sm:$0xf]
    %v81 = vld [vmem:[#allocation5 + $0x30] sm:$0xf]
    %v82 = vld [vmem:[#allocation5 + $0x34] sm:$0xf]
    %v83 = vld [vmem:[#allocation5 + $0x38] sm:$0xf]
    %v84 = vld [vmem:[#allocation5 + $0x3c] sm:$0xf]
    %v101 = vunpack.c.l.b16 %v69
    %v102 = vunpack.c.l.b16 %v70
    %v103 = vunpack.c.l.b16 %v71
    %v104 = vunpack.c.l.b16 %v72
    %v105 = vunpack.c.l.b16 %v73
    %v106 = vunpack.c.l.b16 %v74
    %v107 = vunpack.c.l.b16 %v75
    %v108 = vunpack.c.l.b16 %v76
    %v109 = vunpack.c.l.b16 %v77
    %v110 = vunpack.c.l.b16 %v78
    %v111 = vunpack.c.l.b16 %v79
    %v112 = vunpack.c.l.b16 %v80
    %v113 = vunpack.c.l.b16 %v81
    %v114 = vunpack.c.l.b16 %v82
    %v115 = vunpack.c.l.b16 %v83
    %v116 = vunpack.c.l.b16 %v84
    %v117 = vpack.c.b16 %v102, %v101
    %v118 = vpack.c.b16 %v104, %v103
    %v119 = vpack.c.b16 %v106, %v105
    %v120 = vpack.c.b16 %v108, %v107
    %v121 = vpack.c.b16 %v110, %v109
    %v122 = vpack.c.b16 %v112, %v111
    %v123 = vpack.c.b16 %v114, %v113
    %v124 = vpack.c.b16 %v116, %v115
    %133 = vmatprep.subr.bf16.mxu0 0
    %134 = vmatpush1.bf16.msra.mxu0 %v117
    %135 = vmatprep.subr.bf16.mxu0 0
    %136 = vmatpush1.bf16.msra.mxu0 %v118
    %137 = vmatprep.subr.bf16.mxu0 0
    %138 = vmatpush1.bf16.msra.mxu0 %v119
    %139 = vmatprep.subr.bf16.mxu0 0
    %140 = vmatpush1.bf16.msra.mxu0 %v120
    %141 = vmatprep.subr.bf16.mxu0 0
    %142 = vmatpush1.bf16.msra.mxu0 %v121
    %143 = vmatprep.subr.bf16.mxu0 0
    %144 = vmatpush1.bf16.msra.mxu0 %v122
    %145 = vmatprep.subr.bf16.mxu0 0
    %146 = vmatpush1.bf16.msra.mxu0 %v123
    %147 = vmatprep.subr.bf16.mxu0 0
    %148 = vmatpush1.bf16.msra.mxu0 %v124
    %149 = vmatprep.subr.bf16.mxu0 0
    %150 = vmatpush1.bf16.msra.mxu0 0
    %151 = vmatprep.subr.bf16.mxu0 0
    %152 = vmatpush1.bf16.msra.mxu0 0
    %153 = vmatprep.subr.bf16.mxu0 0
    %154 = vmatpush1.bf16.msra.mxu0 0
    %155 = vmatprep.subr.bf16.mxu0 0
    %156 = vmatpush1.bf16.msra.mxu0 0
    %157 = vmatprep.subr.bf16.mxu0 0
    %158 = vmatpush1.bf16.msra.mxu0 0
    %159 = vmatprep.subr.bf16.mxu0 0
    %160 = vmatpush1.bf16.msra.mxu0 0
    %161 = vmatprep.subr.bf16.mxu0 0
    %162 = vmatpush1.bf16.msra.mxu0 0
    %163 = vmatprep.subr.bf16.mxu0 0
    %164 = vmatpush1.bf16.msra.mxu0 0
    %165 = vmatprep.mubr.bf16.mxu0 0
    %166 = vmatmul.mubr.bf16.gmra.mrb[0].mxu0 %v67
    %v167 = vpop.f32.mrb[0].mxu0
    %v168 = vadd.f32 0.0, %v167
    %v169 = vpop.f32.mrb[0].mxu0
    %v170 = vpop.f32.mrb[0].mxu0
    %v171 = vpop.f32.mrb[0].mxu0
    %172 = vdwg.mxu0
    %v174 = vlaneseq
    %v175 = vshrl.u32 %v174, 7
    %v176 = vsub.s32 0, %v175
    %v177 = vrot.slane %v68, %v176
    %v179 = vadd.f32 %v177, %v168
    %180 = vst [vmem:[#allocation7] sm:$0xff] %v179
    // Predicated region
    $region30: #{tpu_custom_call.1} parent=1 // pred_check
      _
    $region31: #{tpu_custom_call.1} parent=1 // pred_check_branch
      %182 = sbr.rel (0) target = $region33
    $region32: #{tpu_custom_call.1} parent=1 // pred_region
      %s184 = ssub.s32 128, 128
      %185 = vsyncadd [#allocation4], %s184
      %s187 = sshll.u32 [#allocation7], 4
      %s188 = int_to_ptr.vmem [resolvable:$true] %s187
      %190 = dma.vmem_to_hbm [thread:$0]  %s188, 128, %s5, [#allocation4]
    $region33: #{tpu_custom_call.1} parent=1 // pred_fallthru
      _
    // Predicated region
    $region34: #{tpu_custom_call.1} parent=1 // pred_check
      _
    $region35: #{tpu_custom_call.1} parent=1 // pred_check_branch
      %192 = sbr.rel (0) target = $region37
    $region36: #{tpu_custom_call.1} parent=1 // pred_region
      %193 = dma.done [#allocation4], 128
    $region37: #{tpu_custom_call.1} parent=1 // pred_fallthru
      _
    %194 = vsyncpa [#allocation3], 1
    %195 = vsyncpa [#allocation6], 1
    %196 = vsyncpa [#allocation4], 1

</llo_original>
